<compile_context>
chip_gen: v7x
topology: tpu7x:2x2x1
jax: 0.10.0
libtpu: 0.0.40
codegen_flags: <defaults>
</compile_context>

<pallas_src>
import math

import jax
import jax.numpy as jnp
from jax.experimental import pallas as pl
from jax.experimental.pallas import tpu as pltpu

POSITIONAL_SCALE = 10000.0  # standard transformer value (symbol undefined in source)


# -----------------------------------------------------------------------------
# Kernels (pure elementwise; shared by both tiling paths via broadcasting)
# -----------------------------------------------------------------------------
def _add_kernel(x_ref, pe_ref, o_ref):
    # Tiled path: x/pe/o are (TS, D).  Flat path: x/o are (TB, N), pe is (1, N).
    o_ref[...] = (x_ref[...] + pe_ref[...]).astype(o_ref.dtype)


def _add_mask_kernel(x_ref, pe_ref, m_ref, o_ref):
    # Inverted dropout: mask already contains 0 or 1/(1-p) in the output dtype.
    o_ref[...] = ((x_ref[...] + pe_ref[...]) * m_ref[...]).astype(o_ref.dtype)


# -----------------------------------------------------------------------------
# Parameter (buffer) construction — deterministic, mirrors nn.Module.__init__
# -----------------------------------------------------------------------------
def make_positional_encoding_matrix(sequence_length: int, d_model: int):
    position = jnp.arange(sequence_length, dtype=jnp.float32)[:, None]
    div_term = jnp.exp(
        jnp.arange(0, d_model, 2, dtype=jnp.float32)
        * (-math.log(POSITIONAL_SCALE) / d_model)
    )
    pe = jnp.zeros((sequence_length, d_model), dtype=jnp.float32)
    pe = pe.at[:, 0::2].set(jnp.sin(position * div_term))
    pe = pe.at[:, 1::2].set(jnp.cos(position * div_term))
    return pe  # (S, D); the torch module stores it with a leading unsqueeze(0)


# -----------------------------------------------------------------------------
# Tiling helpers
# -----------------------------------------------------------------------------
def _row_align(itemsize: int) -> int:
    return {4: 8, 2: 16, 1: 32}.get(itemsize, 8)


def _pick_seq_tile(S, D, itemsize, target_bytes, min_tiles=1):
    """Largest row-aligned divisor of S whose (TS, D) block stays <= target."""
    align = _row_align(itemsize)
    if S % align != 0:
        # TODO(synk): ragged S — handle the remainder with a masked/padded tile
        # instead of a full-extent block (can exceed VMEM for huge ragged S*D).
        return S
    ts_cap = (target_bytes // max(1, D * itemsize)) // align * align
    ts_cap = max(align, min(ts_cap, S))
    if min_tiles > 1 and S >= min_tiles * align:
        ts_cap = min(ts_cap, max(align, (S // min_tiles) // align * align))
    for cand in range(ts_cap, 0, -align):
        if S % cand == 0:
            return cand
    return S


def _pick_batch_tile(B, N, itemsize, target_bytes):
    """Row-aligned divisor of B whose (TB, N) flat block stays <= target."""
    align = _row_align(itemsize)
    if B % align != 0:
        return B  # full extent is always legal
    tb_cap = (target_bytes // max(1, N * itemsize)) // align * align
    tb_cap = max(align, min(tb_cap, B))
    for cand in range(tb_cap, 0, -align):
        if B % cand == 0:
            return cand
    return B


def _vmem_cap_bytes() -> int:
    try:
        return int(pltpu.get_tpu_info().vmem_capacity_bytes)
    except Exception:
        return 64 << 20  # conservative: v7x-sized physical VMEM


def _vmem_limit(block_bytes: int, pe_bytes: int, has_mask: bool) -> int:
    streams = 3 if has_mask else 2  # x, out, (mask) — each double-buffered
    need = 2 * streams * block_bytes + 2 * pe_bytes + (2 << 20)
    cap = int(_vmem_cap_bytes() * 0.75)
    return int(min(max(16 << 20, need), cap))


# -----------------------------------------------------------------------------
# Forward wrapper
# -----------------------------------------------------------------------------
def positional_encoding_forward(embeddings, pe_matrix, *, dropout_p=0.0,
                                training=False, rng_key=None,
                                target_block_bytes=4 << 20):
    B, S, D = embeddings.shape
    dtype = embeddings.dtype
    itemsize = jnp.dtype(dtype).itemsize
    align = _row_align(itemsize)

    # Slice PE to the actual sequence length and match the activation dtype in
    # the wrapper (halves PE read bytes for bf16; add runs in native dtype).
    pe = pe_matrix[:S, :].astype(dtype)

    use_dropout = bool(training) and float(dropout_p) > 0.0
    mask = None
    if use_dropout:
        if rng_key is None:
            rng_key = jax.random.PRNGKey(0)
        keep_p = 1.0 - float(dropout_p)
        # TODO(synk): an in-kernel pltpu.prng_random_bits mask would remove this
        # extra B*S*D HBM stream, but that primitive has no interpret lowering.
        keep = jax.random.bernoulli(rng_key, keep_p, (B, S, D))
        mask = keep.astype(dtype) * jnp.asarray(1.0 / keep_p, dtype)

    kernel = _add_mask_kernel if use_dropout else _add_kernel
    N = S * D

    # ---- Batch-folded, lane-dense path for short sequences / small S*D ------
    flat_ok = (N * itemsize <= target_block_bytes) and (
        B % align == 0 or B * N * itemsize <= max(target_block_bytes, 8 << 20)
    )
    if flat_ok:
        TB = _pick_batch_tile(B, N, itemsize, target_block_bytes)
        grid = (B // TB,)
        x2 = embeddings.reshape(B, N)          # free view: contiguous reshape
        pe2 = pe.reshape(1, N)                 # single resident block
        in_specs = [
            pl.BlockSpec((TB, N), lambda i: (i, 0)),
            pl.BlockSpec((1, N), lambda i: (0, 0)),   # same block every step -> fetched once
        ]
        inputs = [x2, pe2]
        if use_dropout:
            in_specs.append(pl.BlockSpec((TB, N), lambda i: (i, 0)))
            inputs.append(mask.reshape(B, N))
        out = pl.pallas_call(
            kernel,
            out_shape=jax.ShapeDtypeStruct((B, N), dtype),
            grid_spec=pltpu.PrefetchScalarGridSpec(
                num_scalar_prefetch=0,
                grid=grid,
                in_specs=in_specs,
                out_specs=pl.BlockSpec((TB, N), lambda i: (i, 0)),
            ),
            compiler_params=pltpu.CompilerParams(
                dimension_semantics=("parallel",),
                vmem_limit_bytes=_vmem_limit(TB * N * itemsize, N * itemsize,
                                             use_dropout),
            ),
        )(*inputs)
        return out.reshape(B, S, D)

    # ---- General path: tile the sequence axis, batch innermost --------------
    # Grid order (seq_tile, batch): the PE block index only depends on the seq
    # tile, so across the innermost (batch) axis it is unchanged and Pallas
    # skips re-fetching it — PE is DMAed once per sequence tile, not once per
    # (tile, batch) step.
    TS = _pick_seq_tile(S, D, itemsize, target_block_bytes,
                        min_tiles=2 if B == 1 else 1)
    grid = (S // TS, B)
    in_specs = [
        pl.BlockSpec((None, TS, D), lambda s, b: (b, s, 0)),
        pl.BlockSpec((TS, D), lambda s, b: (s, 0)),
    ]
    inputs = [embeddings, pe]
    if use_dropout:
        in_specs.append(pl.BlockSpec((None, TS, D), lambda s, b: (b, s, 0)))
        inputs.append(mask)
    block_bytes = TS * D * itemsize
    return pl.pallas_call(
        kernel,
        out_shape=jax.ShapeDtypeStruct((B, S, D), dtype),
        grid_spec=pltpu.PrefetchScalarGridSpec(
            num_scalar_prefetch=0,
            grid=grid,
            in_specs=in_specs,
            out_specs=pl.BlockSpec((None, TS, D), lambda s, b: (b, s, 0)),
        ),
        compiler_params=pltpu.CompilerParams(
            dimension_semantics=("parallel", "parallel"),
            vmem_limit_bytes=_vmem_limit(block_bytes, block_bytes, use_dropout),
        ),
    )(*inputs)


# -----------------------------------------------------------------------------
# Main
# -----------------------------------------------------------------------------
if __name__ == "__main__":
    batch, seq_len, d_model = 2, 8, 32
    dropout_p = 0.1  # identity in eval mode (matches module.eval())

    key = jax.random.PRNGKey(0)
    k_x, k_drop, k_x2 = jax.random.split(key, 3)
    embeddings = jax.random.normal(k_x, (batch, seq_len, d_model), dtype=jnp.float32)
    pe_matrix = make_positional_encoding_matrix(seq_len, d_model)

    # Reference computed BEFORE any kernel call (keeps inputs untouched).
    ref = embeddings + pe_matrix[None, :seq_len, :]

    # 1) Eval-mode forward (deterministic) — exercises the batch-folded path.
    out = positional_encoding_forward(
        embeddings, pe_matrix, dropout_p=dropout_p, training=False
    )
    out = jax.block_until_ready(out)
    assert out.shape == (batch, seq_len, d_model)
    assert jnp.allclose(out, ref, atol=1e-6), "eval-mode mismatch vs reference"

    # 2) Eval-mode forward on a longer sequence with a tiny block target to
    #    exercise the sequence-tiled (seq_tile, batch) grid path.
    seq_len2 = 64
    embeddings2 = jax.random.normal(k_x2, (batch, seq_len2, d_model), dtype=jnp.float32)
    pe_matrix2 = make_positional_encoding_matrix(seq_len2, d_model)
    ref2 = embeddings2 + pe_matrix2[None, :, :]
    out2 = positional_encoding_forward(
        embeddings2, pe_matrix2, dropout_p=dropout_p, training=False,
        target_block_bytes=4096,  # forces TS < S so the tiled path runs
    )
    out2 = jax.block_until_ready(out2)
    assert out2.shape == (batch, seq_len2, d_model)
    assert jnp.allclose(out2, ref2, atol=1e-6), "tiled-path mismatch vs reference"

    # 3) Training-mode forward (stochastic inverted dropout): every element is
    #    either exactly dropped (0) or (x + pe) / (1 - p).
    out_tr = positional_encoding_forward(
        embeddings, pe_matrix, dropout_p=dropout_p, training=True, rng_key=k_drop
    )
    out_tr = jax.block_until_ready(out_tr)
    assert out_tr.shape == (batch, seq_len, d_model)
    scaled_ref = ref / (1.0 - dropout_p)
    structurally_ok = (jnp.abs(out_tr) <= 1e-6) | (jnp.abs(out_tr - scaled_ref) <= 1e-4)
    assert bool(jnp.all(structurally_ok)), "dropout output not {0, (x+pe)/(1-p)}"
    assert bool(jnp.all(jnp.isfinite(out_tr)))

    print("KERNEL_OK")
</pallas_src>

<mosaic_0001>
module attributes {stable_mosaic.version = 11 : i64} {
  func.func @_add_kernel(%arg0: i32, %arg1: memref<2x256xf32, #tpu.memory_space<vmem>>, %arg2: memref<1x256xf32, #tpu.memory_space<vmem>>, %arg3: memref<2x256xf32, #tpu.memory_space<vmem>>) attributes {dimension_semantics = [#tpu.dimension_semantics<parallel>], iteration_bounds = array<i64: 1>, scalar_prefetch = 0 : i64, scratch_operands = 0 : i64, tpu.core_type = #tpu.core_type<tc>, window_params = [{transform_indices = @transform_0, window_bounds = array<i64: 2, 256>}, {pipeline_mode = #tpu.pipeline_mode<synchronous>, transform_indices = @transform_1, window_bounds = array<i64: 1, 256>}, {transform_indices = @transform_2, window_bounds = array<i64: 2, 256>}]} {
    %c0 = arith.constant 0 : index
    %c0_0 = arith.constant 0 : index
    %0 = vector.load %arg1[%c0, %c0_0] : memref<2x256xf32, #tpu.memory_space<vmem>>, vector<2x256xf32>
    %c0_1 = arith.constant 0 : index
    %c0_2 = arith.constant 0 : index
    %1 = vector.load %arg2[%c0_1, %c0_2] : memref<1x256xf32, #tpu.memory_space<vmem>>, vector<1x256xf32>
    %2 = vector.broadcast %1 : vector<1x256xf32> to vector<2x256xf32>
    %3 = arith.addf %0, %2 : vector<2x256xf32>
    %c0_3 = arith.constant 0 : index
    %c0_4 = arith.constant 0 : index
    %4 = vector.load %arg3[%c0_3, %c0_4] : memref<2x256xf32, #tpu.memory_space<vmem>>, vector<2x256xf32>
    tpu.vector_store %arg3[%c0_3, %c0_4], %3 {strides = array<i32>} : memref<2x256xf32, #tpu.memory_space<vmem>>, vector<2x256xf32>,
    return
  }
  func.func @transform_0(%arg0: i32) -> (i32, i32) {
    %c0_i32 = arith.constant 0 : i32
    %c0_i32_0 = arith.constant 0 : i32
    return %arg0, %c0_i32 : i32, i32
  }
  func.func @transform_1(%arg0: i32) -> (i32, i32) {
    %c0_i32 = arith.constant 0 : i32
    %c0_i32_0 = arith.constant 0 : i32
    %c0_i32_1 = arith.constant 0 : i32
    return %c0_i32, %c0_i32_0 : i32, i32
  }
  func.func @transform_2(%arg0: i32) -> (i32, i32) {
    %c0_i32 = arith.constant 0 : i32
    %c0_i32_0 = arith.constant 0 : i32
    return %arg0, %c0_i32 : i32, i32
  }
}

</mosaic_0001>

<llo_original>
// kernel: tpu_custom_call.1
$region0: #{tpu_custom_call.1}
  #allocation0 [shape = 'u32[]', space=smem, size = 0x4, offset = 0x4, fixed_abs, tag = 'smem constant byte address 0x4 - core index']
  #allocation1 [shape = 'u32[144,128]{1,0:T(1,128)}', space=vmem, size = 0x12000, scoped, tag = 'internal scratch']
  %s0 = inlined_call_operand.hbm [shape: f32[2,256], index: 0, kind: input, shape index: {}]
  %s1 = inlined_call_operand.vmem [shape: f32[1,256], index: 1, kind: input, shape index: {}]
  %s2 = inlined_call_operand.hbm [shape: f32[2,256], index: 2, kind: output, shape index: {}]
  %s3 = sld [smem:[#allocation0]]
  $region22: #{tpu_custom_call.1} parent=0
    _
  %s5 = ssub.s32 1, %s3
  %s6 = scalar_select 0, %s5, %s3
  $region1: #{tpu_custom_call.1} parent=0
    #allocation2 [shape = 'u8[2048]{0}', space=vmem, size = 0x800, scoped, tag = 'input window, operand 0, single buffered']
    #allocation3 [shape = 's32[1]{0}', space=sflag, size = 0x4, scoped, tag = 'scoped memory for tpu_custom_call.1']
    #allocation4 [shape = 's32[1]{0}', space=sflag, size = 0x4, scoped, tag = 'scoped memory for tpu_custom_call.1']
    #allocation5 [shape = 'u8[2048]{0}', space=vmem, size = 0x800, scoped, tag = 'output window, operand 0, single buffered']
    %7 = vsyncpa [#allocation3], 0
    %8 = vsyncpa [#allocation4], 0
    // Predicated region
    $region2: #{tpu_custom_call.1} parent=1 // pred_check
      _
    $region3: #{tpu_custom_call.1} parent=1 // pred_check_branch
      %10 = sbr.rel (0) target = $region5
    $region4: #{tpu_custom_call.1} parent=1 // pred_region
      %s12 = ssub.s32 64, 64
      %13 = vsyncadd [#allocation3], %s12
      %s15 = sshll.u32 [#allocation2], 4
      %s16 = int_to_ptr.vmem [resolvable:$true] %s15
      %18 = dma.hbm_to_vmem [thread:$0]  %s0, 64, %s16, [#allocation3]
    $region5: #{tpu_custom_call.1} parent=1 // pred_fallthru
      _
    // Predicated region
    $region6: #{tpu_custom_call.1} parent=1 // pred_check
      _
    $region7: #{tpu_custom_call.1} parent=1 // pred_check_branch
      %20 = sbr.rel (0) target = $region9
    $region8: #{tpu_custom_call.1} parent=1 // pred_region
      _
    $region9: #{tpu_custom_call.1} parent=1 // pred_fallthru
      _
    // Predicated region
    $region10: #{tpu_custom_call.1} parent=1 // pred_check
      _
    $region11: #{tpu_custom_call.1} parent=1 // pred_check_branch
      %22 = sbr.rel (0) target = $region13
    $region12: #{tpu_custom_call.1} parent=1 // pred_region
      %23 = dma.done [#allocation3], 64
    $region13: #{tpu_custom_call.1} parent=1 // pred_fallthru
      _
    %v24 = vld [vmem:[#allocation2] sm:$0xf]
    %v25 = vld [vmem:[%s1] sm:$0x3]
    %v27 = vlaneseq
    %v28 = vshrl.u32 %v27, 7
    %v29 = vsub.s32 0, %v28
    %v30 = vrot.slane %v25, %v29
    %v31 = vlaneseq
    %v32 = vshrl.u32 %v31, 7
    %v33 = vsub.s32 1, %v32
    %v34 = vrot.slane %v25, %v33
    %v35 = vcombine.low %v30, %v34
    %v37 = vunpack.c.l.s4 1983009808
    %v38 = vunpack.c.0.s8 %v37
    %v39 = vlaneseq
    %v40 = vshrl.u32 %v39, 7
    %v41 = vsub.s32 %v38, %v40
    %v42 = vrot.slane %v35, %v41
    %v44 = vadd.f32 %v24, %v42
    %45 = vst [vmem:[#allocation5] sm:$0xf] %v44
    // Predicated region
    $region14: #{tpu_custom_call.1} parent=1 // pred_check
      _
    $region15: #{tpu_custom_call.1} parent=1 // pred_check_branch
      %47 = sbr.rel (0) target = $region17
    $region16: #{tpu_custom_call.1} parent=1 // pred_region
      %s49 = ssub.s32 64, 64
      %50 = vsyncadd [#allocation4], %s49
      %s52 = sshll.u32 [#allocation5], 4
      %s53 = int_to_ptr.vmem [resolvable:$true] %s52
      %55 = dma.vmem_to_hbm [thread:$0]  %s53, 64, %s2, [#allocation4]
    $region17: #{tpu_custom_call.1} parent=1 // pred_fallthru
      _
    // Predicated region
    $region18: #{tpu_custom_call.1} parent=1 // pred_check
      _
    $region19: #{tpu_custom_call.1} parent=1 // pred_check_branch
      %57 = sbr.rel (0) target = $region21
    $region20: #{tpu_custom_call.1} parent=1 // pred_region
      %58 = dma.done [#allocation4], 64
    $region21: #{tpu_custom_call.1} parent=1 // pred_fallthru
      _
    %59 = vsyncpa [#allocation3], 1
    %60 = vsyncpa [#allocation4], 1

</llo_original>
